<compile_context>
chip_gen: v6e
topology: v6e:2x2x1
jax: 0.10.0
libtpu: 0.0.40
codegen_flags: <defaults>
</compile_context>

<pallas_src>
import functools

import jax
import jax.numpy as jnp
from jax.experimental import pallas as pl
from jax.experimental.pallas import tpu as pltpu


def _channel_attention_kernel(x_ref, w1t_ref, w2_ref, o_ref,
                              sum_acc, max_acc,
                              *, inv_hw, spatial, tile_s):
    """One (n, spatial-tile) grid step.

    x_ref:   (C, tile_s)  current spatial tile of sample n (native dtype)
    w1t_ref: (C, R)       fc1 1x1-conv weight, transposed, f32
    w2_ref:  (C, R)       fc2 1x1-conv weight, f32
    o_ref:   (C, 1)       sigmoid channel-attention output for sample n
    sum_acc, max_acc: (C, 1) f32 VMEM accumulators (persist across the sweep)
    """
    s = pl.program_id(1)
    num_s = pl.num_programs(1)

    x = x_ref[...].astype(jnp.float32)                       # (C, tile_s)

    if spatial % tile_s != 0:
        # Tail tile: lanes beyond H*W hold padding -> mask them out.
        lane = jax.lax.broadcasted_iota(jnp.int32, x.shape, 1) + s * tile_s
        valid = lane < spatial
        x_sum = jnp.where(valid, x, 0.0)
        x_max = jnp.where(valid, x, -jnp.inf)
    else:
        x_sum = x
        x_max = x

    tile_sum = jnp.sum(x_sum, axis=-1, keepdims=True)        # (C, 1)
    tile_max = jnp.max(x_max, axis=-1, keepdims=True)        # (C, 1)

    @pl.when(s == 0)
    def _init():
        sum_acc[...] = tile_sum
        max_acc[...] = tile_max

    @pl.when(s > 0)
    def _accumulate():
        sum_acc[...] = sum_acc[...] + tile_sum
        max_acc[...] = jnp.maximum(max_acc[...], tile_max)

    @pl.when(s == num_s - 1)
    def _finalize():
        w1t = w1t_ref[...]                                    # (C, R) f32
        w2 = w2_ref[...]                                      # (C, R) f32

        avg = sum_acc[...] * inv_hw                           # (C, 1)
        mx = max_acc[...]                                     # (C, 1)

        def mlp(v_col):                                       # v_col: (C, 1)
            # fc1: h[r] = sum_c w1[r, c] * v[c]  -> sublane reduce -> (1, R)
            h = jnp.sum(w1t * v_col, axis=0, keepdims=True)
            h = jnp.maximum(h, 0.0)                           # ReLU
            # fc2: o[c] = sum_r w2[c, r] * h[r]  -> lane reduce    -> (C, 1)
            return jnp.sum(w2 * h, axis=1, keepdims=True)

        logits = mlp(avg) + mlp(mx)
        o_ref[...] = jax.nn.sigmoid(logits).astype(o_ref.dtype)


def _choose_tile_s(spatial, channels, itemsize, target_bytes=2 * 1024 * 1024):
    """Lane-dense spatial tile: multiple of 128, ~2 MiB per input block."""
    if spatial * channels * itemsize <= target_bytes:
        return spatial                                        # full extent
    lanes = max(128, target_bytes // max(1, channels * itemsize))
    lanes = max(128, (lanes // 128) * 128)
    return min(spatial, lanes)


def channel_attention(x, w1, w2):
    """ChannelAttention forward.

    x:  (N, C, H, W)
    w1: (R, C)  fc1 1x1-conv weight (no bias), R = C // ratio
    w2: (C, R)  fc2 1x1-conv weight (no bias)
    returns sigmoid(fc2(relu(fc1(avgpool(x)))) + fc2(relu(fc1(maxpool(x)))))
    of shape (N, C, 1, 1).
    """
    N, C, H, W = x.shape
    R = w1.shape[0]
    S = H * W

    # NCHW-native flattening: (N, C, H, W) -> (N, C, H*W). Contiguous reshape,
    # no transpose, no extra HBM traffic.
    x3 = x.reshape(N, C, S)

    itemsize = jnp.dtype(x.dtype).itemsize
    tile_s = _choose_tile_s(S, C, itemsize)
    num_s = pl.cdiv(S, tile_s)

    # Pre-cast / pre-transpose the tiny weights once in the wrapper so the
    # kernel body never re-emits casts or layout changes per grid step.
    w1t = jnp.asarray(w1, jnp.float32).T                      # (C, R)
    w2f = jnp.asarray(w2, jnp.float32)                        # (C, R)

    kernel = functools.partial(
        _channel_attention_kernel,
        inv_hw=1.0 / float(S), spatial=S, tile_s=tile_s)

    out = pl.pallas_call(
        kernel,
        out_shape=jax.ShapeDtypeStruct((N, C, 1), x.dtype),
        grid=(N, num_s),
        in_specs=[
            # x: one (C, tile_s) lane-dense spatial tile of sample n.
            pl.BlockSpec((None, C, tile_s), lambda n, s: (n, 0, s)),
            # Weights: constant index_map -> stay VMEM-resident, DMA'd once.
            pl.BlockSpec((C, R), lambda n, s: (0, 0)),
            pl.BlockSpec((C, R), lambda n, s: (0, 0)),
        ],
        # Output block index is constant along the spatial sweep -> resident
        # accumulator; written back to HBM once per sample.
        out_specs=pl.BlockSpec((None, C, 1), lambda n, s: (n, 0, 0)),
        scratch_shapes=[
            pltpu.VMEM((C, 1), jnp.float32),   # running sum  (for avg pool)
            pltpu.VMEM((C, 1), jnp.float32),   # running max  (for max pool)
        ],
        compiler_params=pltpu.CompilerParams(
            dimension_semantics=("parallel", "arbitrary")),
    )(x3, w1t, w2f)

    return out.reshape(N, C, 1, 1)


class ChannelAttention:
    """JAX/Pallas equivalent of the PyTorch ChannelAttention module (NCHW)."""

    def __init__(self, in_planes, ratio=16, *, key=None, dtype=jnp.float32):
        hidden = in_planes // ratio
        assert hidden >= 1, "in_planes // ratio must be >= 1"
        if key is None:
            key = jax.random.PRNGKey(0)
        k1, k2 = jax.random.split(key)
        # Deterministic Conv2d-default-like (kaiming-uniform) init.
        bound1 = 1.0 / (in_planes ** 0.5)
        bound2 = 1.0 / (hidden ** 0.5)
        self.w1 = jax.random.uniform(k1, (hidden, in_planes), dtype,
                                     -bound1, bound1)          # fc1 weight
        self.w2 = jax.random.uniform(k2, (in_planes, hidden), dtype,
                                     -bound2, bound2)          # fc2 weight

    def __call__(self, x):
        return channel_attention(x, self.w1, self.w2)


def _reference_channel_attention(x, w1, w2):
    """Plain-JAX reference mirroring the PyTorch forward."""
    xf = x.astype(jnp.float32)
    avg = jnp.mean(xf, axis=(2, 3))                            # (N, C)
    mx = jnp.max(xf, axis=(2, 3))                              # (N, C)

    def mlp(v):
        h = jnp.maximum(v @ w1.astype(jnp.float32).T, 0.0)     # (N, R)
        return h @ w2.astype(jnp.float32).T                    # (N, C)

    out = jax.nn.sigmoid(mlp(avg) + mlp(mx))                   # (N, C)
    return out.reshape(out.shape[0], out.shape[1], 1, 1).astype(x.dtype)


if __name__ == "__main__":
    key = jax.random.PRNGKey(0)
    kx, kw = jax.random.split(key)

    # in_planes must be >= ratio for the bottleneck to be non-empty, so use
    # channels=32 with the module-default ratio=16 (hidden=2).
    N, C, H, W = 2, 32, 16, 16
    x = jax.random.normal(kx, (N, C, H, W), dtype=jnp.float32)

    module = ChannelAttention(C, ratio=16, key=kw)
    out = jax.block_until_ready(module(x))

    ref = _reference_channel_attention(x, module.w1, module.w2)
    assert out.shape == (N, C, 1, 1)
    assert jnp.allclose(out, ref, atol=1e-5, rtol=1e-5), \
        float(jnp.max(jnp.abs(out.astype(jnp.float32) - ref.astype(jnp.float32))))

    print("KERNEL_OK")
</pallas_src>

<mosaic_0001>
module attributes {stable_mosaic.version = 11 : i64} {
  func.func @_channel_attention_kernel(%arg0: i32, %arg1: i32, %arg2: memref<1x32x256xf32, #tpu.memory_space<vmem>>, %arg3: memref<32x2xf32, #tpu.memory_space<vmem>>, %arg4: memref<32x2xf32, #tpu.memory_space<vmem>>, %arg5: memref<1x32x1xf32, #tpu.memory_space<vmem>>, %arg6: memref<32x1xf32, #tpu.memory_space<vmem>>, %arg7: memref<32x1xf32, #tpu.memory_space<vmem>>) attributes {dimension_semantics = [#tpu.dimension_semantics<parallel>, #tpu.dimension_semantics<arbitrary>], iteration_bounds = array<i64: 2, 1>, scalar_prefetch = 0 : i64, scratch_operands = 2 : i64, tpu.core_type = #tpu.core_type<tc>, window_params = [{transform_indices = @transform_0, window_bounds = array<i64: 1, 32, 256>}, {pipeline_mode = #tpu.pipeline_mode<synchronous>, transform_indices = @transform_1, window_bounds = array<i64: 32, 2>}, {pipeline_mode = #tpu.pipeline_mode<synchronous>, transform_indices = @transform_2, window_bounds = array<i64: 32, 2>}, {transform_indices = @transform_3, window_bounds = array<i64: 1, 32, 1>}]} {
    %c0 = arith.constant 0 : index
    %c0_0 = arith.constant 0 : index
    %c0_1 = arith.constant 0 : index
    %0 = vector.load %arg2[%c0, %c0_0, %c0_1] : memref<1x32x256xf32, #tpu.memory_space<vmem>>, vector<1x32x256xf32>
    %1 = vector.shape_cast %0 : vector<1x32x256xf32> to vector<32x256xf32>
    %cst = arith.constant dense<0.000000e+00> : vector<32xf32>
    %2 = vector.multi_reduction <add>, %1, %cst [1] : vector<32x256xf32> to vector<32xf32>
    %3 = vector.shape_cast %2 : vector<32xf32> to vector<32x1xf32>
    %cst_2 = arith.constant dense<0xFF800000> : vector<32xf32>
    %4 = vector.multi_reduction <maximumf>, %1, %cst_2 [1] : vector<32x256xf32> to vector<32xf32>
    %5 = vector.shape_cast %4 : vector<32xf32> to vector<32x1xf32>
    %c0_i32 = arith.constant 0 : i32
    %6 = arith.cmpi eq, %arg1, %c0_i32 : i32
    %7 = arith.extui %6 : i1 to i32
    %c0_i32_3 = arith.constant 0 : i32
    %8 = arith.cmpi ne, %7, %c0_i32_3 : i32
    scf.if %8 {
      %c0_8 = arith.constant 0 : index
      %c0_9 = arith.constant 0 : index
      %15 = vector.load %arg6[%c0_8, %c0_9] : memref<32x1xf32, #tpu.memory_space<vmem>>, vector<32x1xf32>
      tpu.vector_store %arg6[%c0_8, %c0_9], %3 {strides = array<i32>} : memref<32x1xf32, #tpu.memory_space<vmem>>, vector<32x1xf32>,
      %c0_10 = arith.constant 0 : index
      %c0_11 = arith.constant 0 : index
      %16 = vector.load %arg7[%c0_10, %c0_11] : memref<32x1xf32, #tpu.memory_space<vmem>>, vector<32x1xf32>
      tpu.vector_store %arg7[%c0_10, %c0_11], %5 {strides = array<i32>} : memref<32x1xf32, #tpu.memory_space<vmem>>, vector<32x1xf32>,
    } else {
    }
    %c0_i32_4 = arith.constant 0 : i32
    %9 = arith.cmpi sgt, %arg1, %c0_i32_4 : i32
    %10 = arith.extui %9 : i1 to i32
    %c0_i32_5 = arith.constant 0 : i32
    %11 = arith.cmpi ne, %10, %c0_i32_5 : i32
    scf.if %11 {
      %c0_8 = arith.constant 0 : index
      %c0_9 = arith.constant 0 : index
      %15 = vector.load %arg6[%c0_8, %c0_9] : memref<32x1xf32, #tpu.memory_space<vmem>>, vector<32x1xf32>
      %16 = arith.addf %15, %3 : vector<32x1xf32>
      %c0_10 = arith.constant 0 : index
      %c0_11 = arith.constant 0 : index
      %17 = vector.load %arg6[%c0_10, %c0_11] : memref<32x1xf32, #tpu.memory_space<vmem>>, vector<32x1xf32>
      tpu.vector_store %arg6[%c0_10, %c0_11], %16 {strides = array<i32>} : memref<32x1xf32, #tpu.memory_space<vmem>>, vector<32x1xf32>,
      %c0_12 = arith.constant 0 : index
      %c0_13 = arith.constant 0 : index
      %18 = vector.load %arg7[%c0_12, %c0_13] : memref<32x1xf32, #tpu.memory_space<vmem>>, vector<32x1xf32>
      %19 = arith.maximumf %18, %5 : vector<32x1xf32>
      %c0_14 = arith.constant 0 : index
      %c0_15 = arith.constant 0 : index
      %20 = vector.load %arg7[%c0_14, %c0_15] : memref<32x1xf32, #tpu.memory_space<vmem>>, vector<32x1xf32>
      tpu.vector_store %arg7[%c0_14, %c0_15], %19 {strides = array<i32>} : memref<32x1xf32, #tpu.memory_space<vmem>>, vector<32x1xf32>,
    } else {
    }
    %c0_i32_6 = arith.constant 0 : i32
    %12 = arith.cmpi eq, %arg1, %c0_i32_6 : i32
    %13 = arith.extui %12 : i1 to i32
    %c0_i32_7 = arith.constant 0 : i32
    %14 = arith.cmpi ne, %13, %c0_i32_7 : i32
    scf.if %14 {
      %c0_8 = arith.constant 0 : index
      %c0_9 = arith.constant 0 : index
      %15 = vector.load %arg3[%c0_8, %c0_9] : memref<32x2xf32, #tpu.memory_space<vmem>>, vector<32x2xf32>
      %c0_10 = arith.constant 0 : index
      %c0_11 = arith.constant 0 : index
      %16 = vector.load %arg4[%c0_10, %c0_11] : memref<32x2xf32, #tpu.memory_space<vmem>>, vector<32x2xf32>
      %c0_12 = arith.constant 0 : index
      %c0_13 = arith.constant 0 : index
      %17 = vector.load %arg6[%c0_12, %c0_13] : memref<32x1xf32, #tpu.memory_space<vmem>>, vector<32x1xf32>
      %cst_14 = arith.constant 3.906250e-03 : f32
      %18 = vector.broadcast %cst_14 : f32 to vector<32x1xf32>
      %19 = arith.mulf %17, %18 : vector<32x1xf32>
      %c0_15 = arith.constant 0 : index
      %c0_16 = arith.constant 0 : index
      %20 = vector.load %arg7[%c0_15, %c0_16] : memref<32x1xf32, #tpu.memory_space<vmem>>, vector<32x1xf32>
      %21 = vector.broadcast %19 : vector<32x1xf32> to vector<32x2xf32>
      %22 = arith.mulf %15, %21 : vector<32x2xf32>
      %cst_17 = arith.constant dense<0.000000e+00> : vector<2xf32>
      %23 = vector.multi_reduction <add>, %22, %cst_17 [0] : vector<32x2xf32> to vector<2xf32>
      %24 = vector.shape_cast %23 : vector<2xf32> to vector<1x2xf32>
      %cst_18 = arith.constant 0.000000e+00 : f32
      %25 = vector.broadcast %cst_18 : f32 to vector<1x2xf32>
      %26 = arith.maximumf %24, %25 : vector<1x2xf32>
      %27 = vector.broadcast %26 : vector<1x2xf32> to vector<32x2xf32>
      %28 = arith.mulf %16, %27 : vector<32x2xf32>
      %cst_19 = arith.constant dense<0.000000e+00> : vector<32xf32>
      %29 = vector.multi_reduction <add>, %28, %cst_19 [1] : vector<32x2xf32> to vector<32xf32>
      %30 = vector.shape_cast %29 : vector<32xf32> to vector<32x1xf32>
      %31 = vector.broadcast %20 : vector<32x1xf32> to vector<32x2xf32>
      %32 = arith.mulf %15, %31 : vector<32x2xf32>
      %cst_20 = arith.constant dense<0.000000e+00> : vector<2xf32>
      %33 = vector.multi_reduction <add>, %32, %cst_20 [0] : vector<32x2xf32> to vector<2xf32>
      %34 = vector.shape_cast %33 : vector<2xf32> to vector<1x2xf32>
      %cst_21 = arith.constant 0.000000e+00 : f32
      %35 = vector.broadcast %cst_21 : f32 to vector<1x2xf32>
      %36 = arith.maximumf %34, %35 : vector<1x2xf32>
      %37 = vector.broadcast %36 : vector<1x2xf32> to vector<32x2xf32>
      %38 = arith.mulf %16, %37 : vector<32x2xf32>
      %cst_22 = arith.constant dense<0.000000e+00> : vector<32xf32>
      %39 = vector.multi_reduction <add>, %38, %cst_22 [1] : vector<32x2xf32> to vector<32xf32>
      %40 = vector.shape_cast %39 : vector<32xf32> to vector<32x1xf32>
      %41 = arith.addf %30, %40 : vector<32x1xf32>
      %42 = arith.negf %41 : vector<32x1xf32>
      %43 = math.exp %42 : vector<32x1xf32>
      %cst_23 = arith.constant 1.000000e+00 : f32
      %44 = vector.broadcast %cst_23 : f32 to vector<32x1xf32>
      %45 = arith.addf %44, %43 : vector<32x1xf32>
      %46 = arith.divf %44, %45 : vector<32x1xf32>
      %c0_24 = arith.constant 0 : index
      %c0_25 = arith.constant 0 : index
      %c0_26 = arith.constant 0 : index
      %47 = vector.load %arg5[%c0_24, %c0_25, %c0_26] : memref<1x32x1xf32, #tpu.memory_space<vmem>>, vector<1x32x1xf32>
      %48 = vector.shape_cast %47 : vector<1x32x1xf32> to vector<32x1xf32>
      %49 = vector.shape_cast %46 : vector<32x1xf32> to vector<1x32x1xf32>
      tpu.vector_store %arg5[%c0_24, %c0_25, %c0_26], %49 {strides = array<i32>} : memref<1x32x1xf32, #tpu.memory_space<vmem>>, vector<1x32x1xf32>,
    } else {
    }
    return
  }
  func.func @transform_0(%arg0: i32, %arg1: i32) -> (i32, i32, i32) {
    %c0_i32 = arith.constant 0 : i32
    %c0_i32_0 = arith.constant 0 : i32
    return %arg0, %c0_i32, %arg1 : i32, i32, i32
  }
  func.func @transform_1(%arg0: i32, %arg1: i32) -> (i32, i32) {
    %c0_i32 = arith.constant 0 : i32
    %c0_i32_0 = arith.constant 0 : i32
    %c0_i32_1 = arith.constant 0 : i32
    return %c0_i32, %c0_i32_0 : i32, i32
  }
  func.func @transform_2(%arg0: i32, %arg1: i32) -> (i32, i32) {
    %c0_i32 = arith.constant 0 : i32
    %c0_i32_0 = arith.constant 0 : i32
    %c0_i32_1 = arith.constant 0 : i32
    return %c0_i32, %c0_i32_0 : i32, i32
  }
  func.func @transform_3(%arg0: i32, %arg1: i32) -> (i32, i32, i32) {
    %c0_i32 = arith.constant 0 : i32
    %c0_i32_0 = arith.constant 0 : i32
    %c0_i32_1 = arith.constant 0 : i32
    return %arg0, %c0_i32, %c0_i32_0 : i32, i32, i32
  }
}

</mosaic_0001>

<llo_original>
// kernel: tpu_custom_call.1
$region0: #{tpu_custom_call.1}
  #allocation0 [shape = 'u32[]', space=smem, size = 0x4, offset = 0x4, fixed_abs, tag = 'smem constant byte address 0x4 - core index']
  #allocation1 [shape = 'u32[144,128]{1,0:T(1,128)}', space=vmem, size = 0x12000, scoped, tag = 'internal scratch']
  #allocation2 [shape = 'f32[32,1]{1,0:T(8,128)}', space=vmem, size = 0x4000, scoped, tag = 'scratch operand']
  #allocation3 [shape = 'f32[32,1]{1,0:T(8,128)}', space=vmem, size = 0x4000, scoped, tag = 'scratch operand']
  %s0 = inlined_call_operand.hbm [shape: f32[2,32,256], index: 0, kind: input, shape index: {}]
  %s1 = inlined_call_operand.vmem [shape: f32[32,2], index: 1, kind: input, shape index: {}]
  %s2 = inlined_call_operand.vmem [shape: f32[32,2], index: 2, kind: input, shape index: {}]
  %s3 = inlined_call_operand.vmem [shape: f32[2,32,1], index: 3, kind: output, shape index: {}]
  %s4 = sld [smem:[#allocation0]]
  $region61: #{tpu_custom_call.1} parent=0
    _
  %s6 = ssub.s32 1, %s4
  %s7 = scalar_select 0, %s6, %s4
  $region1: #{tpu_custom_call.1} parent=0
    #allocation4 [shape = 'u8[65536]{0}', space=vmem, size = 0x10000, scoped, tag = 'input window, operand 0']
    #allocation5 [shape = 's32[2]{0}', space=sflag, size = 0x8, scoped, tag = 'scoped memory for tpu_custom_call.1']
    %8 = vsyncpa [#allocation5], 0
    %s9 = scalar_lea.sflag [#allocation5], 1
    %10 = vsyncpa %s9, 0
    loop: start=0, step=1, limit=4
    $region2: #{tpu_custom_call.1} parent=1 // loop_pre_header
      _
    $region3: #{tpu_custom_call.1} parent=1 // loop_header
      %s12 = sphi 0, %s16
      %p13 = scmp.ge.s32.totalorder %s12, 4
      %s19 = sphi 0, %s31
      %s20 = sphi 0, %s27
      %s21 = sphi 0, %s19
      %s22 = sphi 0, %s20
      %s23 = sphi 0, %s21
      %s24 = sphi 0, %s22
      %s36 = sphi 0, %s38
      %s39 = sphi 0, %s36
      %s40 = sphi 0, %s39
      %s56 = sphi 0, %s40
      %s60 = sphi 0, %s60
      %s62 = sphi 0, %s60
      %s63 = sphi 0, %s62
      %s77 = sphi 0, %s63
      %s81 = sphi 0, %s81
      %s83 = sphi 0, %s81
      %s84 = sphi 0, %s83
      %s98 = sphi 0, %s84
      %s104 = sphi 0, %s106
      %s107 = sphi 0, %s104
      %s108 = sphi 0, %s107
      %s124 = sphi 0, %s108
    $region4: #{tpu_custom_call.1} parent=1 // loop_header_branch
      %15 = sbr.rel (%p13) target = $region8
    $region5: #{tpu_custom_call.1} parent=1 // loop_body
      %s17 = ssub.s32 %s12, 1
      %s18 = ssub.s32 %s12, 2
      %s25 = sadd.s32 1, %s20
      %p26 = scmp.ge.s32.totalorder %s25, 1
      %s27 = scalar_select %p26, 0, %s25
      %s28 = sadd.s32 1, %s19
      %s29 = scalar_select %p26, %s28, %s19
      %p30 = scmp.ge.s32.totalorder %s29, 2
      %s31 = scalar_select %p30, 0, %s29
      %s32 = ssub.s32 %s19, %s31
      %s33 = ssub.s32 %s20, %s27
      %s34 = sor.u32 %s32, %s33
      %p35 = scmp.eq.s32.totalorder %s34, 0
      %s37 = sadd.s32 %s36, 1
      %s38 = scalar_select %p35, %s36, %s37
      %p41 = pneg %p35
      %p42 = scmp.eq.s32.totalorder %s12, 1
      %p43 = por %p41, %p42
      %p44 = scmp.ne.s32.totalorder %s36, %s39
      %p45 = scmp.eq.s32.totalorder %s12, 0
      %p46 = por %p44, %p45
      %p47 = scmp.ne.s32.totalorder %s36, %s39
      %p48 = scmp.eq.s32.totalorder %s17, 1
      %p49 = por %p47, %p48
      %p50 = scmp.ne.s32.totalorder %s39, %s40
      %p51 = scmp.eq.s32.totalorder %s17, 0
      %p52 = por %p50, %p51
      %p53 = scmp.ne.s32.totalorder %s39, %s40
      %p54 = scmp.eq.s32.totalorder %s18, 1
      %p55 = por %p53, %p54
      %p57 = scmp.ne.s32.totalorder %s40, %s56
      %p58 = scmp.eq.s32.totalorder %s18, 0
      %p59 = por %p57, %p58
      %s61 = sadd.s32 %s60, 1
      %p64 = scmp.eq.s32.totalorder %s12, 1
      %p65 = scmp.ne.s32.totalorder %s60, %s62
      %p66 = scmp.eq.s32.totalorder %s12, 0
      %p67 = por %p65, %p66
      %p68 = scmp.ne.s32.totalorder %s60, %s62
      %p69 = scmp.eq.s32.totalorder %s17, 1
      %p70 = por %p68, %p69
      %p71 = scmp.ne.s32.totalorder %s62, %s63
      %p72 = scmp.eq.s32.totalorder %s17, 0
      %p73 = por %p71, %p72
      %p74 = scmp.ne.s32.totalorder %s62, %s63
      %p75 = scmp.eq.s32.totalorder %s18, 1
      %p76 = por %p74, %p75
      %p78 = scmp.ne.s32.totalorder %s63, %s77
      %p79 = scmp.eq.s32.totalorder %s18, 0
      %p80 = por %p78, %p79
      %s82 = sadd.s32 %s81, 1
      %p85 = scmp.eq.s32.totalorder %s12, 1
      %p86 = scmp.ne.s32.totalorder %s81, %s83
      %p87 = scmp.eq.s32.totalorder %s12, 0
      %p88 = por %p86, %p87
      %p89 = scmp.ne.s32.totalorder %s81, %s83
      %p90 = scmp.eq.s32.totalorder %s17, 1
      %p91 = por %p89, %p90
      %p92 = scmp.ne.s32.totalorder %s83, %s84
      %p93 = scmp.eq.s32.totalorder %s17, 0
      %p94 = por %p92, %p93
      %p95 = scmp.ne.s32.totalorder %s83, %s84
      %p96 = scmp.eq.s32.totalorder %s18, 1
      %p97 = por %p95, %p96
      %p99 = scmp.ne.s32.totalorder %s84, %s98
      %p100 = scmp.eq.s32.totalorder %s18, 0
      %p101 = por %p99, %p100
      %s102 = ssub.s32 %s19, %s31
      %p103 = scmp.eq.s32.totalorder %s102, 0
      %s105 = sadd.s32 %s104, 1
      %s106 = scalar_select %p103, %s104, %s105
      %p109 = pneg %p103
      %p110 = scmp.eq.s32.totalorder %s12, 1
      %p111 = por %p109, %p110
      %p112 = scmp.ne.s32.totalorder %s104, %s107
      %p113 = scmp.eq.s32.totalorder %s12, 0
      %p114 = por %p112, %p113
      %p115 = scmp.ne.s32.totalorder %s104, %s107
      %p116 = scmp.eq.s32.totalorder %s17, 1
      %p117 = por %p115, %p116
      %p118 = scmp.ne.s32.totalorder %s107, %s108
      %p119 = scmp.eq.s32.totalorder %s17, 0
      %p120 = por %p118, %p119
      %p121 = scmp.ne.s32.totalorder %s107, %s108
      %p122 = scmp.eq.s32.totalorder %s18, 1
      %p123 = por %p121, %p122
      %p125 = scmp.ne.s32.totalorder %s108, %s124
      %p126 = scmp.eq.s32.totalorder %s18, 0
      %p127 = por %p125, %p126
      %p128 = scmp.le.s32.totalorder 1, %s12
      %p129 = scmp.lt.s32.totalorder %s12, 3
      %p130 = pnand %p128, %p129
      %p131 = pneg %p130
      // Predicated region
      $region9: #{tpu_custom_call.1} parent=5 // pred_check
        _
      $region10: #{tpu_custom_call.1} parent=5 // pred_check_branch
        %133 = sbr.rel (%p130) target = $region12
      $region11: #{tpu_custom_call.1} parent=5 // pred_region
        %s134 = ssub.s32 %s12, 1
        // Predicated region
        $region13: #{tpu_custom_call.1} parent=11 // pred_check
          %p135 = pneg %p73
        $region14: #{tpu_custom_call.1} parent=11 // pred_check_branch
          %137 = sbr.rel (%p135) target = $region16
        $region15: #{tpu_custom_call.1} parent=11 // pred_region
          _
        $region16: #{tpu_custom_call.1} parent=11 // pred_fallthru
          _
        // Predicated region
        $region17: #{tpu_custom_call.1} parent=11 // pred_check
          %p138 = pneg %p94
        $region18: #{tpu_custom_call.1} parent=11 // pred_check_branch
          %140 = sbr.rel (%p138) target = $region20
        $region19: #{tpu_custom_call.1} parent=11 // pred_region
          _
        $region20: #{tpu_custom_call.1} parent=11 // pred_fallthru
          _
      $region12: #{tpu_custom_call.1} parent=5 // pred_fallthru
        _
      %p141 = scmp.lt.s32.totalorder %s12, 2
      // Predicated region
      $region21: #{tpu_custom_call.1} parent=5 // pred_check
        %p142 = pneg %p141
      $region22: #{tpu_custom_call.1} parent=5 // pred_check_branch
        %144 = sbr.rel (%p142) target = $region24
      $region23: #{tpu_custom_call.1} parent=5 // pred_region
        // Predicated region
        $region25: #{tpu_custom_call.1} parent=23 // pred_check
          %p145 = pneg %p46
        $region26: #{tpu_custom_call.1} parent=23 // pred_check_branch
          %147 = sbr.rel (%p145) target = $region28
        $region27: #{tpu_custom_call.1} parent=23 // pred_region
          %s148 = sand.u32 %s36, 1
          %s149 = scalar_lea.sflag [#allocation5], %s148
          %s150 = sand.u32 %s36, 1
          %s151 = smul.addr %s150, 64
          %s152 = scalar_lea.vmem [#allocation4], %s151
          %s153 = smul.u32 2, %s20
          %s155 = ssub.s32 1024, 1024
          %156 = vsyncadd %s149, %s155
          %s157 = smul.addr %s19, 8
          %s158 = sadd.s32 %s153, %s157
          %s159 = smul.addr %s158, 128
          %s160 = scalar_lea.hbm %s0, %s159
          %s161 = sshll.u32 %s152, 4
          %s162 = int_to_ptr.vmem [resolvable:$true] %s161
          %167 = dma.hbm_to_vmem [thread:$0]  %s160, 1024, %s162, %s149, 256, 256, 16
        $region28: #{tpu_custom_call.1} parent=23 // pred_fallthru
          _
      $region24: #{tpu_custom_call.1} parent=5 // pred_fallthru
        _
      %p168 = scmp.le.s32.totalorder 1, %s12
      %p169 = scmp.lt.s32.totalorder %s12, 3
      %p170 = pnand %p168, %p169
      %p171 = pneg %p170
      // Predicated region
      $region29: #{tpu_custom_call.1} parent=5 // pred_check
        _
      $region30: #{tpu_custom_call.1} parent=5 // pred_check_branch
        %173 = sbr.rel (%p170) target = $region32
      $region31: #{tpu_custom_call.1} parent=5 // pred_region
        %s174 = ssub.s32 %s12, 1
        %s175 = sand.u32 %s39, 1
        %s176 = scalar_lea.sflag [#allocation5], %s175
        %s177 = sand.u32 %s39, 1
        %s178 = smul.addr %s177, 64
        %s179 = scalar_lea.vmem [#allocation4], %s178
        // Predicated region
        $region33: #{tpu_custom_call.1} parent=31 // pred_check
          %p180 = pneg %p52
        $region34: #{tpu_custom_call.1} parent=31 // pred_check_branch
          %182 = sbr.rel (%p180) target = $region36
        $region35: #{tpu_custom_call.1} parent=31 // pred_region
          %183 = dma.done %s176, 1024
        $region36: #{tpu_custom_call.1} parent=31 // pred_fallthru
          _
        %s184 = sand.u32 %s39, 1
        %s185 = scalar_lea.sflag [#allocation5], %s184
        %s186 = sand.u32 %s39, 1
        %s187 = smul.addr %s186, 64
        %s188 = scalar_lea.vmem [#allocation4], %s187
        %p189 = pneg %p52
        %p190 = pneg %p49
        %p191 = pneg %p73
        %p192 = pneg %p70
        %p193 = pneg %p94
        %p194 = pneg %p91
        %p195 = pneg %p120
        %p196 = pneg %p117
        %p197 = scmp.lt.s32.totalorder %s21, 1
        %s198 = scalar_select %p197, %s21, 1
        %s199 = smul.addr %s198, 4
        %s200 = smul.addr %s199, 8
        %s201 = scalar_lea.vmem %s3, %s200
        %s202 = smul.u32 2, %s22
        %p203 = scmp.lt.s32.totalorder %s21, 1
        %s204 = scalar_select %p203, %s21, 1
        %s205 = smul.addr %s204, 4
        %s206 = smul.addr %s205, 8
        %s207 = scalar_lea.vmem %s3, %s206
        %v208 = vld [vmem:[%s179] sm:$0xff]
        %v209 = vld [vmem:[%s179 + $0x8] sm:$0xff]
        %v210 = vld [vmem:[%s179 + $0x10] sm:$0xff]
        %v211 = vld [vmem:[%s179 + $0x18] sm:$0xff]
        %v212 = vld [vmem:[%s179 + $0x20] sm:$0xff]
        %v213 = vld [vmem:[%s179 + $0x28] sm:$0xff]
        %v214 = vld [vmem:[%s179 + $0x30] sm:$0xff]
        %v215 = vld [vmem:[%s179 + $0x38] sm:$0xff]
        %v216 = vadd.f32 %v208, %v209
        %217 = vadd.xlane.f32.xlu0 %v216
        %v218 = vpop.xlane.xlu0 %217
        %v219 = vadd.f32 %v210, %v211
        %220 = vadd.xlane.f32.xlu0 %v219
        %v221 = vpop.xlane.xlu0 %220
        %v222 = vadd.f32 %v212, %v213
        %223 = vadd.xlane.f32.xlu0 %v222
        %v224 = vpop.xlane.xlu0 %223
        %v225 = vadd.f32 %v214, %v215
        %226 = vadd.xlane.f32.xlu0 %v225
        %v227 = vpop.xlane.xlu0 %226
        %v228 = vmax.f32 %v208, %v209
        %229 = vmax.xlane.f32.xlu0 %v228
        %v230 = vpop.xlane.xlu0 %229
        %v231 = vmax.f32 %v210, %v211
        %232 = vmax.xlane.f32.xlu0 %v231
        %v233 = vpop.xlane.xlu0 %232
        %v234 = vmax.f32 %v212, %v213
        %235 = vmax.xlane.f32.xlu0 %v234
        %v236 = vpop.xlane.xlu0 %235
        %v237 = vmax.f32 %v214, %v215
        %238 = vmax.xlane.f32.xlu0 %v237
        %v239 = vpop.xlane.xlu0 %238
        %p240 = scmp.eq.s32.totalorder %s22, 0
        // Predicated region
        $region37: #{tpu_custom_call.1} parent=31 // pred_check
          %p241 = pneg %p240
        $region38: #{tpu_custom_call.1} parent=31 // pred_check_branch
          %243 = sbr.rel (%p241) target = $region40
        $region39: #{tpu_custom_call.1} parent=31 // pred_region
          %vm244 = vcmask 7168
          %245 = vst.msk [vmem:[#allocation2] sm:$0xff] %vm244, %v218
          %246 = vst.msk [vmem:[#allocation2 + $0x8] sm:$0xff] %vm244, %v221
          %247 = vst.msk [vmem:[#allocation2 + $0x10] sm:$0xff] %vm244, %v224
          %248 = vst.msk [vmem:[#allocation2 + $0x18] sm:$0xff] %vm244, %v227
          %249 = vst.msk [vmem:[#allocation3] sm:$0xff] %vm244, %v230
          %250 = vst.msk [vmem:[#allocation3 + $0x8] sm:$0xff] %vm244, %v233
          %251 = vst.msk [vmem:[#allocation3 + $0x10] sm:$0xff] %vm244, %v236
          %252 = vst.msk [vmem:[#allocation3 + $0x18] sm:$0xff] %vm244, %v239
        $region40: #{tpu_custom_call.1} parent=31 // pred_fallthru
          _
        %p253 = scmp.gt.s32.totalorder %s22, 0
        // Predicated region
        $region41: #{tpu_custom_call.1} parent=31 // pred_check
          %p254 = pneg %p253
        $region42: #{tpu_custom_call.1} parent=31 // pred_check_branch
          %256 = sbr.rel (%p254) target = $region44
        $region43: #{tpu_custom_call.1} parent=31 // pred_region
          %v257 = vld [vmem:[#allocation2] sm:$0xff]
          %v258 = vld [vmem:[#allocation2 + $0x8] sm:$0xff]
          %v259 = vld [vmem:[#allocation2 + $0x10] sm:$0xff]
          %v260 = vld [vmem:[#allocation2 + $0x18] sm:$0xff]
          %v261 = vadd.f32 %v257, %v218
          %v262 = vadd.f32 %v258, %v221
          %v263 = vadd.f32 %v259, %v224
          %v264 = vadd.f32 %v260, %v227
          %vm265 = vcmask 7168
          %266 = vst.msk [vmem:[#allocation2] sm:$0xff] %vm265, %v261
          %267 = vst.msk [vmem:[#allocation2 + $0x8] sm:$0xff] %vm265, %v262
          %268 = vst.msk [vmem:[#allocation2 + $0x10] sm:$0xff] %vm265, %v263
          %269 = vst.msk [vmem:[#allocation2 + $0x18] sm:$0xff] %vm265, %v264
          %v270 = vld [vmem:[#allocation3] sm:$0xff]
          %v271 = vld [vmem:[#allocation3 + $0x8] sm:$0xff]
          %v272 = vld [vmem:[#allocation3 + $0x10] sm:$0xff]
          %v273 = vld [vmem:[#allocation3 + $0x18] sm:$0xff]
          %v274 = vmax.f32 %v270, %v230
          %v275 = vmax.f32 %v271, %v233
          %v276 = vmax.f32 %v272, %v236
          %v277 = vmax.f32 %v273, %v239
          %278 = vst.msk [vmem:[#allocation3] sm:$0xff] %vm265, %v274
          %279 = vst.msk [vmem:[#allocation3 + $0x8] sm:$0xff] %vm265, %v275
          %280 = vst.msk [vmem:[#allocation3 + $0x10] sm:$0xff] %vm265, %v276
          %281 = vst.msk [vmem:[#allocation3 + $0x18] sm:$0xff] %vm265, %v277
        $region44: #{tpu_custom_call.1} parent=31 // pred_fallthru
          _
        // Predicated region
        $region45: #{tpu_custom_call.1} parent=31 // pred_check
          %p282 = pneg %p240
        $region46: #{tpu_custom_call.1} parent=31 // pred_check_branch
          %284 = sbr.rel (%p282) target = $region48
        $region47: #{tpu_custom_call.1} parent=31 // pred_region
          %v285 = vld [vmem:[%s1] sm:$0xff]
          %v286 = vld [vmem:[%s1 + $0x8] sm:$0xff]
          %v287 = vld [vmem:[%s1 + $0x10] sm:$0xff]
          %v288 = vld [vmem:[%s1 + $0x18] sm:$0xff]
          %v289 = vld [vmem:[%s2] sm:$0xff]
          %v290 = vld [vmem:[%s2 + $0x8] sm:$0xff]
          %v291 = vld [vmem:[%s2 + $0x10] sm:$0xff]
          %v292 = vld [vmem:[%s2 + $0x18] sm:$0xff]
          %v293 = vld [vmem:[#allocation2] sm:$0xff]
          %v294 = vld [vmem:[#allocation2 + $0x8] sm:$0xff]
          %v295 = vld [vmem:[#allocation2 + $0x10] sm:$0xff]
          %v296 = vld [vmem:[#allocation2 + $0x18] sm:$0xff]
          %v297 = vmul.f32 %v293, 0.00390625
          %v298 = vmul.f32 %v294, 0.00390625
          %v299 = vmul.f32 %v295, 0.00390625
          %v300 = vmul.f32 %v296, 0.00390625
          %v301 = vld [vmem:[#allocation3] sm:$0xff]
          %v302 = vld [vmem:[#allocation3 + $0x8] sm:$0xff]
          %v303 = vld [vmem:[#allocation3 + $0x10] sm:$0xff]
          %v304 = vld [vmem:[#allocation3 + $0x18] sm:$0xff]
          %306 = vset.pattern.permute.xlu0 0
          %307 = vperm.xlu0 %306, %v297
          %v308 = vpop.permute.xlu0 %307
          %311 = vset.pattern.permute.xlu0 0
          %312 = vperm.xlu0 %311, %v298
          %v313 = vpop.permute.xlu0 %312
          %316 = vset.pattern.permute.xlu0 0
          %317 = vperm.xlu0 %316, %v299
          %v318 = vpop.permute.xlu0 %317
          %321 = vset.pattern.permute.xlu0 0
          %322 = vperm.xlu0 %321, %v300
          %v323 = vpop.permute.xlu0 %322
          %v325 = vmul.f32 %v285, %v308
          %v326 = vmul.f32 %v286, %v313
          %v327 = vmul.f32 %v287, %v318
          %v328 = vmul.f32 %v288, %v323
          %vm329 = vcmask 15360
          %v330 = vsel %vm329, %v325, 0.0
          %v331 = vsel %vm329, %v326, 0.0
          %v332 = vadd.f32 %v330, %v331
          %v333 = vsel %vm329, %v327, 0.0
          %v334 = vadd.f32 %v332, %v333
          %v335 = vsel %vm329, %v328, 0.0
          %v336 = vadd.f32 %v334, %v335
          %v337 = vrot.slane %v336, 4
          %v338 = vadd.f32 %v336, %v337
          %v339 = vrot.slane %v338, 2
          %v340 = vadd.f32 %v338, %v339
          %v341 = vrot.slane %v340, 1
          %v342 = vadd.f32 %v340, %v341
          %v343 = vmax.f32 %v342, 0.0
          %v344 = vmul.f32 %v289, %v343
          %v345 = vmul.f32 %v290, %v343
          %v346 = vmul.f32 %v291, %v343
          %v347 = vmul.f32 %v292, %v343
          %v348 = vsel %vm329, %v344, 0.0
          %349 = vadd.xlane.f32.xlu0 %v348
          %v350 = vpop.xlane.xlu0 %349
          %v351 = vsel %vm329, %v345, 0.0
          %352 = vadd.xlane.f32.xlu0 %v351
          %v353 = vpop.xlane.xlu0 %352
          %v354 = vsel %vm329, %v346, 0.0
          %355 = vadd.xlane.f32.xlu0 %v354
          %v356 = vpop.xlane.xlu0 %355
          %v357 = vsel %vm329, %v347, 0.0
          %358 = vadd.xlane.f32.xlu0 %v357
          %v359 = vpop.xlane.xlu0 %358
          %361 = vset.pattern.permute.xlu0 0
          %362 = vperm.xlu0 %361, %v301
          %v363 = vpop.permute.xlu0 %362
          %366 = vset.pattern.permute.xlu0 0
          %367 = vperm.xlu0 %366, %v302
          %v368 = vpop.permute.xlu0 %367
          %371 = vset.pattern.permute.xlu0 0
          %372 = vperm.xlu0 %371, %v303
          %v373 = vpop.permute.xlu0 %372
          %376 = vset.pattern.permute.xlu0 0
          %377 = vperm.xlu0 %376, %v304
          %v378 = vpop.permute.xlu0 %377
          %v380 = vmul.f32 %v285, %v363
          %v381 = vmul.f32 %v286, %v368
          %v382 = vmul.f32 %v287, %v373
          %v383 = vmul.f32 %v288, %v378
          %v384 = vsel %vm329, %v380, 0.0
          %v385 = vsel %vm329, %v381, 0.0
          %v386 = vadd.f32 %v384, %v385
          %v387 = vsel %vm329, %v382, 0.0
          %v388 = vadd.f32 %v386, %v387
          %v389 = vsel %vm329, %v383, 0.0
          %v390 = vadd.f32 %v388, %v389
          %v391 = vrot.slane %v390, 4
          %v392 = vadd.f32 %v390, %v391
          %v393 = vrot.slane %v392, 2
          %v394 = vadd.f32 %v392, %v393
          %v395 = vrot.slane %v394, 1
          %v396 = vadd.f32 %v394, %v395
          %v397 = vmax.f32 %v396, 0.0
          %v398 = vmul.f32 %v289, %v397
          %v399 = vmul.f32 %v290, %v397
          %v400 = vmul.f32 %v291, %v397
          %v401 = vmul.f32 %v292, %v397
          %v402 = vsel %vm329, %v398, 0.0
          %403 = vadd.xlane.f32.xlu0 %v402
          %v404 = vpop.xlane.xlu0 %403
          %v405 = vsel %vm329, %v399, 0.0
          %406 = vadd.xlane.f32.xlu0 %v405
          %v407 = vpop.xlane.xlu0 %406
          %v408 = vsel %vm329, %v400, 0.0
          %409 = vadd.xlane.f32.xlu0 %v408
          %v410 = vpop.xlane.xlu0 %409
          %v411 = vsel %vm329, %v401, 0.0
          %412 = vadd.xlane.f32.xlu0 %v411
          %v413 = vpop.xlane.xlu0 %412
          %v414 = vadd.f32 %v350, %v404
          %v415 = vadd.f32 %v353, %v407
          %v416 = vadd.f32 %v356, %v410
          %v417 = vadd.f32 %v359, %v413
          %v418 = vxor.u32 %v414, 2147483648
          %v419 = vxor.u32 %v415, 2147483648
          %v420 = vxor.u32 %v416, 2147483648
          %v421 = vxor.u32 %v417, 2147483648
          %v422 = vmul.f32 %v418, 1.442695
          %v423 = vpow.pop %v422
          %v424 = vmul.f32 %v419, 1.442695
          %v425 = vpow.pop %v424
          %v426 = vmul.f32 %v420, 1.442695
          %v427 = vpow.pop %v426
          %v428 = vmul.f32 %v421, 1.442695
          %v429 = vpow.pop %v428
          %v430 = vadd.f32 %v423, 1.0
          %v431 = vadd.f32 %v425, 1.0
          %v432 = vadd.f32 %v427, 1.0
          %v433 = vadd.f32 %v429, 1.0
          %v434 = vrcp.pop %v430
          %v435 = vmul.f32 1.0, %v434
          %v436 = vrcp.pop %v431
          %v437 = vmul.f32 1.0, %v436
          %v438 = vrcp.pop %v432
          %v439 = vmul.f32 1.0, %v438
          %v440 = vrcp.pop %v433
          %v441 = vmul.f32 1.0, %v440
          %vm442 = vcmask 7168
          %443 = vst.msk [vmem:[%s207] sm:$0xff] %vm442, %v435
          %444 = vst.msk [vmem:[%s207 + $0x8] sm:$0xff] %vm442, %v437
          %445 = vst.msk [vmem:[%s207 + $0x10] sm:$0xff] %vm442, %v439
          %446 = vst.msk [vmem:[%s207 + $0x18] sm:$0xff] %vm442, %v441
        $region48: #{tpu_custom_call.1} parent=31 // pred_fallthru
          _
        %p447 = scmp.lt.s32.totalorder %s21, 1
        %s448 = scalar_select %p447, %s21, 1
        %s449 = smul.addr %s448, 4
        %s450 = smul.addr %s449, 8
        %s451 = scalar_lea.vmem %s3, %s450
        // Predicated region
        $region49: #{tpu_custom_call.1} parent=31 // pred_check
          %p452 = pneg %p117
        $region50: #{tpu_custom_call.1} parent=31 // pred_check_branch
          %454 = sbr.rel (%p452) target = $region52
        $region51: #{tpu_custom_call.1} parent=31 // pred_region
          _
        $region52: #{tpu_custom_call.1} parent=31 // pred_fallthru
          _
      $region32: #{tpu_custom_call.1} parent=5 // pred_fallthru
        _
      %p455 = scmp.le.s32.totalorder 2, %s12
      // Predicated region
      $region53: #{tpu_custom_call.1} parent=5 // pred_check
        %p456 = pneg %p455
      $region54: #{tpu_custom_call.1} parent=5 // pred_check_branch
        %458 = sbr.rel (%p456) target = $region56
      $region55: #{tpu_custom_call.1} parent=5 // pred_region
        %s459 = ssub.s32 %s12, 2
        // Predicated region
        $region57: #{tpu_custom_call.1} parent=55 // pred_check
          %p460 = pneg %p123
        $region58: #{tpu_custom_call.1} parent=55 // pred_check_branch
          %462 = sbr.rel (%p460) target = $region60
        $region59: #{tpu_custom_call.1} parent=55 // pred_region
          %p463 = scmp.lt.s32.totalorder %s23, 1
          %s464 = scalar_select %p463, %s23, 1
          %s465 = smul.addr %s464, 4
          %s466 = smul.addr %s465, 8
          %s467 = scalar_lea.vmem %s3, %s466
        $region60: #{tpu_custom_call.1} parent=55 // pred_fallthru
          _
      $region56: #{tpu_custom_call.1} parent=5 // pred_fallthru
        _
    $region6: #{tpu_custom_call.1} parent=1 // loop_footer
      %s16 = sadd.s32 1, %s12
    $region7: #{tpu_custom_call.1} parent=1 // loop_footer_branch
      %11 = sbr.rel target = $region3
    $region8: #{tpu_custom_call.1} parent=1 // loop_exit
      _
    %468 = vsyncpa [#allocation5], 1
    %s469 = scalar_lea.sflag [#allocation5], 1
    %470 = vsyncpa %s469, 1

</llo_original>
